<compile_context>
chip_gen: v7x
topology: tpu7x:2x2x1
jax: 0.10.0
libtpu: 0.0.40
codegen_flags: <defaults>
</compile_context>

<pallas_src>
import math
from functools import lru_cache, partial

import jax
import jax.numpy as jnp
from jax.experimental import pallas as pl
from jax.experimental.pallas import tpu as pltpu

DTYPE = jnp.float32          # residual stream / LN / LayerScale / bias precision
WDTYPE = jnp.bfloat16        # matmul weight storage (MXU-native, halves HBM/VMEM traffic)


# ----------------------- VMEM budget / capability probes --------------------

@lru_cache(maxsize=None)
def _vmem_limit_bytes():
    """Generation-aware scoped-VMEM request: never ask for the full physical VMEM."""
    try:
        phys = int(pltpu.get_tpu_info().vmem_capacity_bytes)
    except Exception:
        return 64 * 1024 * 1024                     # unknown generation: safe default
    if phys <= 64 * 1024 * 1024:                    # v7x-class: 64 MiB per TensorCore
        return 48 * 1024 * 1024
    return 96 * 1024 * 1024                         # v5e / v6e: 128 MiB physical


@lru_cache(maxsize=None)
def _single_buffer_ok():
    """Probe pipeline_mode=pl.Buffered(1) support (single-buffer constant weights)."""
    try:
        def _probe(x_ref, o_ref):
            o_ref[...] = x_ref[...]
        out = pl.pallas_call(
            _probe,
            out_shape=jax.ShapeDtypeStruct((8, 128), jnp.float32),
            grid=(1,),
            in_specs=[pl.BlockSpec((8, 128), lambda i: (0, 0),
                                   pipeline_mode=pl.Buffered(1))],
            out_specs=pl.BlockSpec((8, 128), lambda i: (0, 0)),
        )(jnp.zeros((8, 128), jnp.float32))
        jax.block_until_ready(out)
        return True
    except Exception:
        return False


def _const_spec(shape, index_map):
    """BlockSpec for an operand whose block index never changes across the grid:
    single-buffer it (halves its VMEM reservation) when the runtime supports it."""
    if _single_buffer_ok():
        return pl.BlockSpec(shape, index_map, pipeline_mode=pl.Buffered(1))
    return pl.BlockSpec(shape, index_map)


@lru_cache(maxsize=None)
def _batched_heads_ok():
    """Probe whether in-kernel head split (reshape -> (H,T,hd) transpose + batched
    einsums + merge back) lowers on this Mosaic build."""
    try:
        def _probe(x_ref, o_ref):
            x = x_ref[...]                                            # (16, 32) bf16
            xh = x.reshape(16, 4, 8).transpose(1, 0, 2)               # (4, 16, 8)
            s = jnp.einsum('hqd,hkd->hqk', xh, xh,
                           preferred_element_type=jnp.float32)        # (4, 16, 16)
            o = jnp.einsum('hqk,hkd->hqd', s.astype(x.dtype), xh,
                           preferred_element_type=jnp.float32)        # (4, 16, 8)
            o_ref[...] = o.transpose(1, 0, 2).reshape(16, 32).astype(o_ref.dtype)
        out = pl.pallas_call(
            _probe,
            out_shape=jax.ShapeDtypeStruct((16, 32), jnp.float32),
        )(jnp.zeros((16, 32), jnp.bfloat16))
        jax.block_until_ready(out)
        return True
    except Exception:
        return False


# ----------------------------- kernel helpers -------------------------------

def _ln(x, w, b, eps=1e-6):
    """fp32 LayerNorm with one-pass variance (E[x^2] - mu^2) -> one XLU reduction less."""
    mu = jnp.mean(x, axis=-1, keepdims=True)
    var = jnp.maximum(jnp.mean(x * x, axis=-1, keepdims=True) - mu * mu, 0.0)
    return (x - mu) * jax.lax.rsqrt(var + eps) * w + b


def _bf16(x):
    return x.astype(jnp.bfloat16)


def _attention_batched(q, k, v, num_heads, n_valid):
    """q: (Nq, D) bf16, k/v: (T, D) bf16 -> (Nq, D) fp32.
    Leading-axis head batching: one relayout per tensor instead of per-head lane
    slices, no masked hd-wide scratch stores, MXU stays fed across heads."""
    Nq, D = q.shape
    T = k.shape[0]
    hd = D // num_heads
    qh = q.reshape(Nq, num_heads, hd).transpose(1, 0, 2)              # (H, Nq, hd)
    kh = k.reshape(T, num_heads, hd).transpose(1, 0, 2)               # (H, T,  hd)
    vh = v.reshape(T, num_heads, hd).transpose(1, 0, 2)               # (H, T,  hd)
    s = jnp.einsum('hqd,hkd->hqk', qh, kh,
                   preferred_element_type=jnp.float32)                # (H, Nq, T)
    if n_valid != T:                                                  # mask padded prompt keys
        kidx = jax.lax.broadcasted_iota(jnp.int32, s.shape, 2)
        s = jnp.where(kidx < n_valid, s, jnp.float32(-1e30))
    s = s - jnp.max(s, axis=-1, keepdims=True)
    p = jnp.exp(s)
    p = p * pl.reciprocal(jnp.sum(p, axis=-1, keepdims=True), approx=True)
    oh = jnp.einsum('hqk,hkd->hqd', p.astype(q.dtype), vh,
                    preferred_element_type=jnp.float32)               # (H, Nq, hd)
    return oh.transpose(1, 0, 2).reshape(Nq, D)


def _attention_looped(q, k, v, num_heads, n_valid):
    """Fallback per-head loop (always lowers); used only if the batched path
    fails the lowering probe."""
    Nq, D = q.shape
    T = k.shape[0]
    hd = D // num_heads
    outs = []
    for h in range(num_heads):
        sl = slice(h * hd, (h + 1) * hd)
        s = jnp.einsum('qd,kd->qk', q[:, sl], k[:, sl],
                       preferred_element_type=jnp.float32)
        if n_valid != T:
            kidx = jax.lax.broadcasted_iota(jnp.int32, s.shape, 1)
            s = jnp.where(kidx < n_valid, s, jnp.float32(-1e30))
        s = s - jnp.max(s, axis=-1, keepdims=True)
        p = jnp.exp(s)
        p = p * pl.reciprocal(jnp.sum(p, axis=-1, keepdims=True), approx=True)
        outs.append(jnp.dot(p.astype(q.dtype), v[:, sl],
                            preferred_element_type=jnp.float32))
    return jnp.concatenate(outs, axis=-1)


# ----------------------------- Pallas kernels -------------------------------

def _matmul_bias_kernel(x_ref, w_ref, b_ref, o_ref):
    x = x_ref[...].astype(jnp.bfloat16)            # cast in-kernel: no extra HBM pass
    o_ref[...] = (jnp.dot(x, w_ref[...], preferred_element_type=jnp.float32)
                  + b_ref[...]).astype(o_ref.dtype)


def matmul_bias(x, w, b, tm=256):
    """(M, K) @ (K, N) + (N,): bf16 MXU operands, fp32 accumulation, M-tiled.
    No host-side pads or trailing slices."""
    M, K = x.shape
    N = w.shape[1]
    tm = min(tm, M)
    return pl.pallas_call(
        _matmul_bias_kernel,
        out_shape=jax.ShapeDtypeStruct((M, N), DTYPE),
        grid=(pl.cdiv(M, tm),),
        in_specs=[pl.BlockSpec((tm, K), lambda i: (i, 0)),
                  _const_spec((K, N), lambda i: (0, 0)),
                  _const_spec((1, N), lambda i: (0, 0))],
        out_specs=pl.BlockSpec((tm, N), lambda i: (i, 0)),
        compiler_params=pltpu.CompilerParams(
            dimension_semantics=("parallel",),
            vmem_limit_bytes=_vmem_limit_bytes()),
    )(x, w, b.reshape(1, N).astype(DTYPE))


def _vit_blocks_kernel(num_heads, npt, batched_heads,
                       tok_ref, prm_ref,
                       ln1w, ln1b, qkvw, qkvb, projw, projb, ls1,
                       ln2w, ln2b, fc1w, fc1b, fc2w, fc2b, ls2,
                       o_ref):
    """One (batch b, layer l) grid step of the fused VPT-deep block stack.

    The residual stream lives in o_ref (same output block for every l at fixed b),
    so tokens never round-trip HBM between layers; per-layer weights/prompts stream
    in and are double-buffered (next layer prefetches under this layer's compute)."""
    l = pl.program_id(1)

    @pl.when(l == 0)
    def _():
        o_ref[...] = tok_ref[...]

    xf = o_ref[0].astype(jnp.float32)              # (N, D)  fusion residual stream
    pr = prm_ref[0].astype(jnp.float32)            # (Pp, D) this layer's VPT prompt (8-padded)
    N, D = xf.shape
    Pp = pr.shape[0]
    T = N + Pp

    # Fusion tokens first so the surviving rows are the leading (8-aligned) slice.
    # Attention is permutation-invariant over the key set and the prompt outputs are
    # discarded, so this ordering is exactly equivalent to the reference VPT block.
    allx = jnp.concatenate([xf, pr], axis=0)       # (T, D)

    # --- attention branch ---
    h = _ln(allx, ln1w[0], ln1b[0])
    qkv = (jnp.dot(_bf16(h), qkvw[0], preferred_element_type=jnp.float32)
           + qkvb[0])                              # (T, 3D); 1/sqrt(hd) folded into W_q/b_q
    attn_fn = _attention_batched if batched_heads else _attention_looped
    attn = attn_fn(_bf16(qkv[:N, :D]),             # queries: fusion tokens only
                   _bf16(qkv[:, D:2 * D]),
                   _bf16(qkv[:, 2 * D:]),
                   num_heads, N + npt)             # only the real prompt keys are valid
    attn = (jnp.dot(_bf16(attn), projw[0], preferred_element_type=jnp.float32)
            + projb[0])
    x = xf + ls1[0] * attn                         # fp32 LayerScale + residual

    # --- MLP branch ---
    h2 = _ln(x, ln2w[0], ln2b[0])
    h2 = (jnp.dot(_bf16(h2), fc1w[0], preferred_element_type=jnp.float32)
          + fc1b[0])
    # TODO(synk): torch nn.GELU defaults to exact erf; tanh approximation used for EUP speed.
    h2 = jax.nn.gelu(h2, approximate=True)
    h2 = (jnp.dot(_bf16(h2), fc2w[0], preferred_element_type=jnp.float32)
          + fc2b[0])
    x = x + ls2[0] * h2

    o_ref[0] = x.astype(o_ref.dtype)


_BLOCK_WEIGHT_NAMES = ('ln1_w', 'ln1_b', 'qkv_w', 'qkv_b', 'proj_w', 'proj_b', 'ls1',
                       'ln2_w', 'ln2_b', 'fc1_w', 'fc1_b', 'fc2_w', 'fc2_b', 'ls2')


def run_vit_blocks(tokens, params, num_heads, npt):
    """Whole VPT-deep block stack in one pallas_call: grid=(B, depth), depth
    'arbitrary' with a constant output index along it so the residual stream is
    VMEM-resident across all layers (no inter-layer HBM writeback)."""
    B, N, D = tokens.shape
    prompts = params['prompts']                    # (depth, Pp, D), Pp % 8 == 0
    depth, Pp, _ = prompts.shape
    weights = tuple(params['blocks'][n] for n in _BLOCK_WEIGHT_NAMES)

    tok_map = lambda b, l: (b, 0, 0)               # constant along depth -> resident
    lyr_map = lambda b, l: (l, 0, 0)               # streams layer-by-layer (double-buffered)
    in_specs = [pl.BlockSpec((1, N, D), tok_map),
                pl.BlockSpec((1, Pp, D), lyr_map)]
    in_specs += [pl.BlockSpec((1,) + w.shape[1:], lyr_map) for w in weights]

    # TODO(synk): for B == 1 on v7x add a query-tile "parallel" axis so both TCs work.
    return pl.pallas_call(
        partial(_vit_blocks_kernel, num_heads, npt, _batched_heads_ok()),
        out_shape=jax.ShapeDtypeStruct((B, N, D), tokens.dtype),
        grid=(B, depth),
        in_specs=in_specs,
        out_specs=pl.BlockSpec((1, N, D), tok_map),
        compiler_params=pltpu.CompilerParams(
            dimension_semantics=("parallel", "arbitrary"),
            vmem_limit_bytes=_vmem_limit_bytes()),
    )(tokens, prompts, *weights)


def _head_kernel(x_ref, nw, nb, w1, b1, w2, b2, o_ref):
    x = x_ref[0].astype(jnp.float32)               # (tq, D)
    xn = _ln(x, nw[...], nb[...])                  # final vit.norm (per-token, x slice only)
    h = jax.nn.gelu(
        jnp.dot(_bf16(xn), w1[...], preferred_element_type=jnp.float32) + b1[...],
        approximate=True)                          # fused score|regression hidden (tq, 2D)
    raw = (jnp.dot(_bf16(h), w2[...], preferred_element_type=jnp.float32)
           + b2[...])                              # (tq, 8): col 0 = score, 1..4 = bbox
    col = jax.lax.broadcasted_iota(jnp.int32, raw.shape, 1)
    out = jnp.where((col >= 1) & (col <= 4), jax.nn.sigmoid(raw), raw)
    o_ref[0] = out.astype(o_ref.dtype)             # single lane-padded 8-wide slab


def _pick_head_tile(n):
    cap = min(256, max(8, n // 2))
    for t in range(cap, 7, -1):
        if n % t == 0 and t % 8 == 0:
            return t
    return n


def run_head(x_feat, params):
    B, Nx, D = x_feat.shape
    hp = params['head']
    weights = (params['norm_w'], params['norm_b'],
               hp['w1'], hp['b1'], hp['w2'], hp['b2'])
    tq = _pick_head_tile(Nx)                       # 2nd parallel axis keeps both v7x TCs busy
    in_specs = [pl.BlockSpec((1, tq, D), lambda b, t: (b, t, 0))]
    in_specs += [_const_spec(w.shape, lambda b, t: (0, 0)) for w in weights]
    return pl.pallas_call(
        _head_kernel,
        out_shape=jax.ShapeDtypeStruct((B, Nx, 8), x_feat.dtype),
        grid=(B, Nx // tq),
        in_specs=in_specs,
        out_specs=pl.BlockSpec((1, tq, 8), lambda b, t: (b, t, 0)),
        compiler_params=pltpu.CompilerParams(
            dimension_semantics=("parallel", "parallel"),
            vmem_limit_bytes=_vmem_limit_bytes()),
    )(x_feat, *weights)


# ------------------------------- model glue ---------------------------------

def patch_embed(img, w, b, patch_size):
    """Conv2d(kernel=stride=patch) expressed as patch-flatten + Pallas matmul."""
    B, C, Himg, Wimg = img.shape
    P = patch_size
    Hp, Wp = Himg // P, Wimg // P
    patches = img.reshape(B, C, Hp, P, Wp, P)
    patches = jnp.transpose(patches, (0, 2, 4, 1, 3, 5))   # (B, Hp, Wp, C, P, P)
    patches = patches.reshape(B * Hp * Wp, C * P * P)
    tok = matmul_bias(patches, w, b)                       # (B*Np, D) fp32
    return tok.reshape(B, Hp * Wp, -1)


def lorat_forward(params, z, x, z_feat_mask, *, z_size, x_size, patch_size,
                  num_heads, num_prompt_tokens):
    B = z.shape[0]
    D = params['pos_embed'].shape[-1]
    z_W, z_H = z_size
    x_W, x_H = x_size

    # ------ _z_feat ------
    z_tok = patch_embed(z, params['patch_w'], params['patch_b'], patch_size)
    pos = params['pos_embed']                               # (1, x_H*x_W, D)
    pos_z = pos.reshape(1, x_H, x_W, D)[:, :z_H, :z_W, :].reshape(1, z_H * z_W, D)
    z_tok = z_tok + pos_z
    z_tok = z_tok + params['token_type_embed'][z_feat_mask.reshape(B, -1)]

    # ------ _x_feat ------
    x_tok = patch_embed(x, params['patch_w'], params['patch_b'], patch_size)
    x_tok = x_tok + pos
    x_tok = x_tok + params['token_type_embed'][2][None, None, :]

    # ------ _fusion (VPT-deep): all blocks fused into one pallas_call; prompt concat,
    #        padded-key masking and prompt strip all happen inside the kernel ------
    fusion = jnp.concatenate([z_tok, x_tok], axis=1)
    n_z = z_tok.shape[1]
    fusion = run_vit_blocks(fusion, params, num_heads, num_prompt_tokens)

    # final LayerNorm is per-token, so applying it only to the x slice (inside the
    # head kernel) is equivalent to norm(full)[:, n_z:, :]
    x_feat = fusion[:, n_z:, :]

    # ------ head ------
    # TODO(synk): exact MlpAnchorFreeHead internals are not in the reference snippet;
    # implemented as fused Linear-GELU-Linear branches (score + sigmoid bbox).
    head_out = run_head(x_feat, params)                     # (B, Nx, 8) lane-padded
    score_map = head_out[:, :, 0].reshape(B, x_H, x_W)
    bbox_map = head_out[:, :, 1:5].reshape(B, x_H, x_W, 4)
    return score_map, bbox_map


# ------------------------------ parameter init -------------------------------

def init_params(key, *, embed_dim, depth, num_heads, patch_size, in_chans,
                z_size, x_size, num_prompt_tokens, mlp_ratio=4):
    D = embed_dim
    keys = iter(jax.random.split(key, 256))
    nk = lambda: next(keys)

    def trunc(shape, std=0.02):
        return (std * jax.random.truncated_normal(nk(), -2.0, 2.0, shape)).astype(DTYPE)

    x_W, x_H = x_size
    cpp = in_chans * patch_size * patch_size
    params = {
        'patch_w': trunc((cpp, D)).astype(WDTYPE),
        'patch_b': jnp.zeros((D,), DTYPE),
        # synthetic stand-in for interpolate_pos_encoding(vit.pos_embed)
        'pos_embed': trunc((1, x_H * x_W, D)),
        'token_type_embed': trunc((3, D)),
        'norm_w': jnp.ones((1, D), DTYPE),
        'norm_b': jnp.zeros((1, D), DTYPE),
    }

    # VPT prompts: uniform(-val, val), val = sqrt(6 / (3*P*P + D)); padded on the token
    # axis to a multiple of 8 (padded keys are masked inside the block kernel) and
    # stacked over depth so one pallas_call can stream them layer-by-layer.
    val = math.sqrt(6.0 / float(3 * patch_size * patch_size + D))
    Pp = ((num_prompt_tokens + 7) // 8) * 8
    prompts = jnp.stack([
        jax.random.uniform(nk(), (num_prompt_tokens, D), DTYPE, -val, val)
        for _ in range(depth)], axis=0)                     # (depth, npt, D)
    params['prompts'] = jnp.pad(prompts, ((0, 0), (0, Pp - num_prompt_tokens), (0, 0)))

    # Block weights stacked over depth (with a real DINOv2 checkpoint this stacking and
    # the q-scale fold below would happen once at load time).
    H = mlp_ratio * D
    scale = 1.0 / math.sqrt(D // num_heads)
    # fold 1/sqrt(head_dim) into the q output columns of W_qkv / b_qkv
    qscale = jnp.concatenate([jnp.full((D,), scale, DTYPE), jnp.ones((2 * D,), DTYPE)])

    def stack(fn):
        return jnp.stack([fn() for _ in range(depth)], axis=0)

    params['blocks'] = dict(
        ln1_w=jnp.ones((depth, 1, D), DTYPE), ln1_b=jnp.zeros((depth, 1, D), DTYPE),
        qkv_w=stack(lambda: trunc((D, 3 * D)) * qscale).astype(WDTYPE),
        qkv_b=(jnp.zeros((depth, 1, 3 * D), DTYPE) * qscale),
        proj_w=stack(lambda: trunc((D, D))).astype(WDTYPE),
        proj_b=jnp.zeros((depth, 1, D), DTYPE),
        ls1=jnp.full((depth, 1, D), 1e-5, DTYPE),
        ln2_w=jnp.ones((depth, 1, D), DTYPE), ln2_b=jnp.zeros((depth, 1, D), DTYPE),
        fc1_w=stack(lambda: trunc((D, H))).astype(WDTYPE),
        fc1_b=jnp.zeros((depth, 1, H), DTYPE),
        fc2_w=stack(lambda: trunc((H, D))).astype(WDTYPE),
        fc2_b=jnp.zeros((depth, 1, D), DTYPE),
        ls2=jnp.full((depth, 1, D), 1e-5, DTYPE),
    )

    # Head: score branch (D->D->1) and regression branch (D->D->4) fused so the kernel
    # runs one (D,2D) and one (2D,8) matmul with a single lane-padded output.
    s1_w, r1_w = trunc((D, D)), trunc((D, D))
    s2_w, r2_w = trunc((D, 1)), trunc((D, 4))
    w1 = jnp.concatenate([s1_w, r1_w], axis=1)              # (D, 2D)
    w2 = jnp.zeros((2 * D, 8), DTYPE)
    w2 = w2.at[:D, 0:1].set(s2_w).at[D:, 1:5].set(r2_w)     # block layout: [score | bbox | pad]
    params['head'] = dict(
        w1=w1.astype(WDTYPE), b1=jnp.zeros((1, 2 * D), DTYPE),
        w2=w2.astype(WDTYPE), b2=jnp.zeros((1, 8), DTYPE),
    )
    return params


# ---------------------------------- main -------------------------------------

if __name__ == "__main__":
    B = 2
    C = 3
    P = 2                       # patch size
    z_size = (4, 4)             # (W, H) of template features   -> template image 8x8
    x_size = (8, 8)             # (W, H) of search features      -> search image 16x16
    D = 32
    depth = 2
    num_heads = 4
    num_prompt = 4              # padded to 8 inside init_params; extra keys masked in-kernel

    key = jax.random.PRNGKey(0)
    kp, kz, kx, km = jax.random.split(key, 4)
    params = init_params(kp, embed_dim=D, depth=depth, num_heads=num_heads,
                         patch_size=P, in_chans=C, z_size=z_size, x_size=x_size,
                         num_prompt_tokens=num_prompt)

    z = jax.random.normal(kz, (B, C, z_size[1] * P, z_size[0] * P), DTYPE)
    x = jax.random.normal(kx, (B, C, x_size[1] * P, x_size[0] * P), DTYPE)
    z_feat_mask = jax.random.randint(km, (B, z_size[1], z_size[0]), 0, 2)

    score_map, bbox_map = lorat_forward(
        params, z, x, z_feat_mask, z_size=z_size, x_size=x_size,
        patch_size=P, num_heads=num_heads, num_prompt_tokens=num_prompt)
    jax.block_until_ready((score_map, bbox_map))

    assert score_map.shape == (B, x_size[1], x_size[0])
    assert bbox_map.shape == (B, x_size[1], x_size[0], 4)
    print("KERNEL_OK")
</pallas_src>

<mosaic_0001>
module attributes {stable_mosaic.version = 11 : i64} {
  func.func @_probe(%arg0: i32, %arg1: memref<8x128xf32, #tpu.memory_space<vmem>>, %arg2: memref<8x128xf32, #tpu.memory_space<vmem>>) attributes {dimension_semantics = [#tpu.dimension_semantics<arbitrary>], iteration_bounds = array<i64: 1>, scalar_prefetch = 0 : i64, scratch_operands = 0 : i64, tpu.core_type = #tpu.core_type<tc>, window_params = [{pipeline_mode = #tpu.pipeline_mode<synchronous>, transform_indices = @transform_0, window_bounds = array<i64: 8, 128>}, {pipeline_mode = #tpu.pipeline_mode<synchronous>, transform_indices = @transform_1, window_bounds = array<i64: 8, 128>}]} {
    %c0 = arith.constant 0 : index
    %c0_0 = arith.constant 0 : index
    %0 = vector.load %arg1[%c0, %c0_0] : memref<8x128xf32, #tpu.memory_space<vmem>>, vector<8x128xf32>
    %c0_1 = arith.constant 0 : index
    %c0_2 = arith.constant 0 : index
    %1 = vector.load %arg2[%c0_1, %c0_2] : memref<8x128xf32, #tpu.memory_space<vmem>>, vector<8x128xf32>
    tpu.vector_store %arg2[%c0_1, %c0_2], %0 {strides = array<i32>} : memref<8x128xf32, #tpu.memory_space<vmem>>, vector<8x128xf32>,
    return
  }
  func.func @transform_0(%arg0: i32) -> (i32, i32) {
    %c0_i32 = arith.constant 0 : i32
    %c0_i32_0 = arith.constant 0 : i32
    %c0_i32_1 = arith.constant 0 : i32
    return %c0_i32, %c0_i32_0 : i32, i32
  }
  func.func @transform_1(%arg0: i32) -> (i32, i32) {
    %c0_i32 = arith.constant 0 : i32
    %c0_i32_0 = arith.constant 0 : i32
    %c0_i32_1 = arith.constant 0 : i32
    return %c0_i32, %c0_i32_0 : i32, i32
  }
}

module attributes {stable_mosaic.version = 11 : i64} {
  func.func @_matmul_bias_kernel(%arg0: i32, %arg1: memref<32x12xf32, #tpu.memory_space<vmem>>, %arg2: memref<12x32xbf16, #tpu.memory_space<vmem>>, %arg3: memref<1x32xf32, #tpu.memory_space<vmem>>, %arg4: memref<32x32xf32, #tpu.memory_space<vmem>>) attributes {dimension_semantics = [#tpu.dimension_semantics<parallel>], iteration_bounds = array<i64: 1>, scalar_prefetch = 0 : i64, scratch_operands = 0 : i64, tpu.core_type = #tpu.core_type<tc>, window_params = [{transform_indices = @transform_0, window_bounds = array<i64: 32, 12>}, {pipeline_mode = #tpu.pipeline_mode<synchronous>, transform_indices = @transform_1, window_bounds = array<i64: 12, 32>}, {pipeline_mode = #tpu.pipeline_mode<synchronous>, transform_indices = @transform_2, window_bounds = array<i64: 1, 32>}, {transform_indices = @transform_3, window_bounds = array<i64: 32, 32>}]} {
    %c0 = arith.constant 0 : index
    %c0_0 = arith.constant 0 : index
    %0 = vector.load %arg1[%c0, %c0_0] : memref<32x12xf32, #tpu.memory_space<vmem>>, vector<32x12xf32>
    %1 = arith.truncf %0 : vector<32x12xf32> to vector<32x12xbf16>
    %c0_1 = arith.constant 0 : index
    %c0_2 = arith.constant 0 : index
    %2 = vector.load %arg2[%c0_1, %c0_2] : memref<12x32xbf16, #tpu.memory_space<vmem>>, vector<12x32xbf16>
    %cst = arith.constant dense<0.000000e+00> : vector<32x32xf32>
    %3 = tpu.matmul %1, %2, %cst {dimension_numbers = #tpu.dot_dimension_numbers<[1], [0], [0], [1], [0, 0, 1, 1], [], []>} : vector<32x12xbf16>, vector<12x32xbf16>, vector<32x32xf32> -> vector<32x32xf32>
    %c0_3 = arith.constant 0 : index
    %c0_4 = arith.constant 0 : index
    %4 = vector.load %arg3[%c0_3, %c0_4] : memref<1x32xf32, #tpu.memory_space<vmem>>, vector<1x32xf32>
    %5 = vector.broadcast %4 : vector<1x32xf32> to vector<32x32xf32>
    %6 = arith.addf %3, %5 : vector<32x32xf32>
    %c0_5 = arith.constant 0 : index
    %c0_6 = arith.constant 0 : index
    %7 = vector.load %arg4[%c0_5, %c0_6] : memref<32x32xf32, #tpu.memory_space<vmem>>, vector<32x32xf32>
    tpu.vector_store %arg4[%c0_5, %c0_6], %6 {strides = array<i32>} : memref<32x32xf32, #tpu.memory_space<vmem>>, vector<32x32xf32>,
    return
  }
  func.func @transform_0(%arg0: i32) -> (i32, i32) {
    %c0_i32 = arith.constant 0 : i32
    %c0_i32_0 = arith.constant 0 : i32
    return %arg0, %c0_i32 : i32, i32
  }
  func.func @transform_1(%arg0: i32) -> (i32, i32) {
    %c0_i32 = arith.constant 0 : i32
    %c0_i32_0 = arith.constant 0 : i32
    %c0_i32_1 = arith.constant 0 : i32
    return %c0_i32, %c0_i32_0 : i32, i32
  }
  func.func @transform_2(%arg0: i32) -> (i32, i32) {
    %c0_i32 = arith.constant 0 : i32
    %c0_i32_0 = arith.constant 0 : i32
    %c0_i32_1 = arith.constant 0 : i32
    return %c0_i32, %c0_i32_0 : i32, i32
  }
  func.func @transform_3(%arg0: i32) -> (i32, i32) {
    %c0_i32 = arith.constant 0 : i32
    %c0_i32_0 = arith.constant 0 : i32
    return %arg0, %c0_i32 : i32, i32
  }
}

</mosaic_0001>

<llo_original>
// kernel: tpu_custom_call.1
$region0: #{tpu_custom_call.1}
  #allocation0 [shape = 'u32[]', space=smem, size = 0x4, offset = 0x4, fixed_abs, tag = 'smem constant byte address 0x4 - core index']
  #allocation1 [shape = 'u32[144,128]{1,0:T(1,128)}', space=vmem, size = 0x12000, scoped, tag = 'internal scratch']
  %s0 = inlined_call_operand.hbm [shape: f32[8,128], index: 0, kind: input, shape index: {}]
  %s1 = inlined_call_operand.hbm [shape: f32[8,128], index: 1, kind: output, shape index: {}]
  %s2 = sld [smem:[#allocation0]]
  $region18: #{tpu_custom_call.1} parent=0
    _
  %s4 = ssub.s32 1, %s2
  %s5 = scalar_select 0, %s4, %s2
  $region1: #{tpu_custom_call.1} parent=0
    #allocation2 [shape = 'u8[4096]{0}', space=vmem, size = 0x1000, scoped, tag = 'input window, operand 0, single buffered']
    #allocation3 [shape = 's32[1]{0}', space=sflag, size = 0x4, scoped, tag = 'scoped memory for tpu_custom_call.1']
    #allocation4 [shape = 's32[1]{0}', space=sflag, size = 0x4, scoped, tag = 'scoped memory for tpu_custom_call.1']
    #allocation5 [shape = 'u8[4096]{0}', space=vmem, size = 0x1000, scoped, tag = 'output window, operand 0, single buffered']
    %6 = vsyncpa [#allocation3], 0
    %7 = vsyncpa [#allocation4], 0
    // Predicated region
    $region2: #{tpu_custom_call.1} parent=1 // pred_check
      _
    $region3: #{tpu_custom_call.1} parent=1 // pred_check_branch
      %9 = sbr.rel (0) target = $region5
    $region4: #{tpu_custom_call.1} parent=1 // pred_region
      %s11 = ssub.s32 128, 128
      %12 = vsyncadd [#allocation3], %s11
      %s14 = sshll.u32 [#allocation2], 4
      %s15 = int_to_ptr.vmem [resolvable:$true] %s14
      %17 = dma.hbm_to_vmem [thread:$0]  %s0, 128, %s15, [#allocation3]
    $region5: #{tpu_custom_call.1} parent=1 // pred_fallthru
      _
    // Predicated region
    $region6: #{tpu_custom_call.1} parent=1 // pred_check
      _
    $region7: #{tpu_custom_call.1} parent=1 // pred_check_branch
      %19 = sbr.rel (0) target = $region9
    $region8: #{tpu_custom_call.1} parent=1 // pred_region
      %20 = dma.done [#allocation3], 128
    $region9: #{tpu_custom_call.1} parent=1 // pred_fallthru
      _
    %v21 = vld [vmem:[#allocation2] sm:$0xff]
    %22 = vst [vmem:[#allocation5] sm:$0xff] %v21
    // Predicated region
    $region10: #{tpu_custom_call.1} parent=1 // pred_check
      _
    $region11: #{tpu_custom_call.1} parent=1 // pred_check_branch
      %24 = sbr.rel (0) target = $region13
    $region12: #{tpu_custom_call.1} parent=1 // pred_region
      %s26 = ssub.s32 128, 128
      %27 = vsyncadd [#allocation4], %s26
      %s29 = sshll.u32 [#allocation5], 4
      %s30 = int_to_ptr.vmem [resolvable:$true] %s29
      %32 = dma.vmem_to_hbm [thread:$0]  %s30, 128, %s1, [#allocation4]
    $region13: #{tpu_custom_call.1} parent=1 // pred_fallthru
      _
    // Predicated region
    $region14: #{tpu_custom_call.1} parent=1 // pred_check
      _
    $region15: #{tpu_custom_call.1} parent=1 // pred_check_branch
      %34 = sbr.rel (0) target = $region17
    $region16: #{tpu_custom_call.1} parent=1 // pred_region
      %35 = dma.done [#allocation4], 128
    $region17: #{tpu_custom_call.1} parent=1 // pred_fallthru
      _
    %36 = vsyncpa [#allocation3], 1
    %37 = vsyncpa [#allocation4], 1

// kernel: tpu_custom_call.1
$region0: #{tpu_custom_call.1}
  #allocation0 [shape = 'u32[]', space=smem, size = 0x4, offset = 0x4, fixed_abs, tag = 'smem constant byte address 0x4 - core index']
  #allocation1 [shape = 'u32[144,128]{1,0:T(1,128)}', space=vmem, size = 0x12000, scoped, tag = 'internal scratch']
  %s0 = inlined_call_operand.hbm [shape: f32[32,12], index: 0, kind: input, shape index: {}]
  %s1 = inlined_call_operand.hbm [shape: bf16[12,32], index: 1, kind: input, shape index: {}]
  %s2 = inlined_call_operand.hbm [shape: f32[1,32], index: 2, kind: input, shape index: {}]
  %s3 = inlined_call_operand.hbm [shape: f32[32,32], index: 3, kind: output, shape index: {}]
  %s4 = sld [smem:[#allocation0]]
  $region34: #{tpu_custom_call.1} parent=0
    _
  %s6 = ssub.s32 1, %s4
  %s7 = scalar_select 0, %s6, %s4
  $region1: #{tpu_custom_call.1} parent=0
    #allocation2 [shape = 'u8[16384]{0}', space=vmem, size = 0x4000, scoped, tag = 'input window, operand 0, single buffered']
    #allocation3 [shape = 's32[1]{0}', space=sflag, size = 0x4, scoped, tag = 'scoped memory for tpu_custom_call.1']
    #allocation4 [shape = 's32[1]{0}', space=sflag, size = 0x4, scoped, tag = 'scoped memory for tpu_custom_call.1']
    #allocation5 [shape = 'u8[4096]{0}', space=vmem, size = 0x1000, scoped, tag = 'input window, operand 1, single buffered']
    #allocation6 [shape = 's32[1]{0}', space=sflag, size = 0x4, scoped, tag = 'scoped memory for tpu_custom_call.1']
    #allocation7 [shape = 'u8[512]{0}', space=vmem, size = 0x400, scoped, tag = 'input window, operand 2, single buffered']
    #allocation8 [shape = 'u8[16384]{0}', space=vmem, size = 0x4000, scoped, tag = 'output window, operand 0, single buffered']
    %8 = vsyncpa [#allocation3], 0
    %9 = vsyncpa [#allocation6], 0
    %10 = vsyncpa [#allocation4], 0
    // Predicated region
    $region2: #{tpu_custom_call.1} parent=1 // pred_check
      _
    $region3: #{tpu_custom_call.1} parent=1 // pred_check_branch
      %12 = sbr.rel (0) target = $region5
    $region4: #{tpu_custom_call.1} parent=1 // pred_region
      %s14 = ssub.s32 512, 512
      %15 = vsyncadd [#allocation3], %s14
      %s16 = sshll.u32 [#allocation2], 4
      %s17 = int_to_ptr.vmem [resolvable:$true] %s16
      %22 = dma.hbm_to_vmem [thread:$0]  %s0, 512, %s17, [#allocation3], 128, 128, 8
    $region5: #{tpu_custom_call.1} parent=1 // pred_fallthru
      _
    // Predicated region
    $region6: #{tpu_custom_call.1} parent=1 // pred_check
      _
    $region7: #{tpu_custom_call.1} parent=1 // pred_check_branch
      %24 = sbr.rel (0) target = $region9
    $region8: #{tpu_custom_call.1} parent=1 // pred_region
      %s26 = ssub.s32 128, 128
      %27 = vsyncadd [#allocation6], %s26
      %s28 = sshll.u32 [#allocation5], 4
      %s29 = int_to_ptr.vmem [resolvable:$true] %s28
      %34 = dma.hbm_to_vmem [thread:$0]  %s1, 128, %s29, [#allocation6], 64, 64, 4
    $region9: #{tpu_custom_call.1} parent=1 // pred_fallthru
      _
    // Predicated region
    $region10: #{tpu_custom_call.1} parent=1 // pred_check
      _
    $region11: #{tpu_custom_call.1} parent=1 // pred_check_branch
      %36 = sbr.rel (0) target = $region13
    $region12: #{tpu_custom_call.1} parent=1 // pred_region
      %s38 = ssub.s32 16, 16
      %39 = vsyncadd [#allocation6], %s38
      %s41 = sshll.u32 [#allocation7], 4
      %s42 = int_to_ptr.vmem [resolvable:$true] %s41
      %44 = dma.hbm_to_vmem [thread:$0]  %s2, 16, %s42, [#allocation6]
    $region13: #{tpu_custom_call.1} parent=1 // pred_fallthru
      _
    // Predicated region
    $region14: #{tpu_custom_call.1} parent=1 // pred_check
      _
    $region15: #{tpu_custom_call.1} parent=1 // pred_check_branch
      %46 = sbr.rel (0) target = $region17
    $region16: #{tpu_custom_call.1} parent=1 // pred_region
      %47 = dma.done [#allocation3], 512
    $region17: #{tpu_custom_call.1} parent=1 // pred_fallthru
      _
    // Predicated region
    $region18: #{tpu_custom_call.1} parent=1 // pred_check
      _
    $region19: #{tpu_custom_call.1} parent=1 // pred_check_branch
      %49 = sbr.rel (0) target = $region21
    $region20: #{tpu_custom_call.1} parent=1 // pred_region
      %50 = dma.done [#allocation6], 128
    $region21: #{tpu_custom_call.1} parent=1 // pred_fallthru
      _
    // Predicated region
    $region22: #{tpu_custom_call.1} parent=1 // pred_check
      _
    $region23: #{tpu_custom_call.1} parent=1 // pred_check_branch
      %52 = sbr.rel (0) target = $region25
    $region24: #{tpu_custom_call.1} parent=1 // pred_region
      %53 = dma.done [#allocation6], 16
    $region25: #{tpu_custom_call.1} parent=1 // pred_fallthru
      _
    %v55 = vld [vmem:[#allocation2] sm:$0xff]
    %v56 = vld [vmem:[#allocation2 + $0x8] sm:$0xff]
    %v57 = vld [vmem:[#allocation2 + $0x10] sm:$0xff]
    %v58 = vld [vmem:[#allocation2 + $0x18] sm:$0xff]
    %v59 = vpack.c.bf16 %v56, %v55
    %v60 = vpack.c.bf16 %v58, %v57
    %v61 = vld [vmem:[#allocation5] sm:$0xf]
    %v62 = vld [vmem:[#allocation5 + $0x4] sm:$0x3]
    %v63 = vld [vmem:[#allocation7] sm:$0x1]
    %v65 = vlaneseq
    %v66 = vshrl.u32 %v65, 7
    %v67 = vsub.s32 0, %v66
    %v68 = vrot.slane %v63, %v67
    %v72 = vunpack.c.l.b16 %v61
    %v73 = vunpack.c.l.b16 %v62
    %v74 = vpack.c.b16 %v73, %v72
    %vm75 = vcmask 97280
    %v77 = vsel %vm75, %v59, 0
    %v80 = vsel %vm75, %v60, 0
    %vm82 = vcmask 1045504
    %v84 = vsel %vm82, %v74, 0
    %86 = vmatprep.subr.bf16.mxu0 0
    %87 = vmatpush1.bf16.msra.mxu0 %v84
    %88 = vmatprep.subr.bf16.mxu0 0
    %89 = vmatpush1.bf16.msra.mxu0 0
    %90 = vmatprep.subr.bf16.mxu0 0
    %91 = vmatpush1.bf16.msra.mxu0 0
    %92 = vmatprep.subr.bf16.mxu0 0
    %93 = vmatpush1.bf16.msra.mxu0 0
    %94 = vmatprep.subr.bf16.mxu0 0
    %95 = vmatpush1.bf16.msra.mxu0 0
    %96 = vmatprep.subr.bf16.mxu0 0
    %97 = vmatpush1.bf16.msra.mxu0 0
    %98 = vmatprep.subr.bf16.mxu0 0
    %99 = vmatpush1.bf16.msra.mxu0 0
    %100 = vmatprep.subr.bf16.mxu0 0
    %101 = vmatpush1.bf16.msra.mxu0 0
    %102 = vmatprep.subr.bf16.mxu0 0
    %103 = vmatpush1.bf16.msra.mxu0 0
    %104 = vmatprep.subr.bf16.mxu0 0
    %105 = vmatpush1.bf16.msra.mxu0 0
    %106 = vmatprep.subr.bf16.mxu0 0
    %107 = vmatpush1.bf16.msra.mxu0 0
    %108 = vmatprep.subr.bf16.mxu0 0
    %109 = vmatpush1.bf16.msra.mxu0 0
    %110 = vmatprep.subr.bf16.mxu0 0
    %111 = vmatpush1.bf16.msra.mxu0 0
    %112 = vmatprep.subr.bf16.mxu0 0
    %113 = vmatpush1.bf16.msra.mxu0 0
    %114 = vmatprep.subr.bf16.mxu0 0
    %115 = vmatpush1.bf16.msra.mxu0 0
    %116 = vmatprep.subr.bf16.mxu0 0
    %117 = vmatpush1.bf16.msra.mxu0 0
    %118 = vmatprep.mubr.bf16.mxu0 0
    %119 = vmatmul.mubr.bf16.gmra.mrb[0].mxu0 %v77
    %v120 = vpop.f32.mrb[0].mxu0
    %v121 = vadd.f32 %v68, %v120
    %v122 = vpop.f32.mrb[0].mxu0
    %v123 = vpop.f32.mrb[0].mxu0
    %v124 = vadd.f32 %v68, %v123
    %v125 = vpop.f32.mrb[0].mxu0
    %126 = vmatprep.mubr.bf16.mxu0 0
    %127 = vmatmul.mubr.bf16.gmra.mrb[0].mxu0 %v80
    %v128 = vpop.f32.mrb[0].mxu0
    %v129 = vadd.f32 %v68, %v128
    %v130 = vpop.f32.mrb[0].mxu0
    %v131 = vpop.f32.mrb[0].mxu0
    %v132 = vadd.f32 %v68, %v131
    %v133 = vpop.f32.mrb[0].mxu0
    %134 = vdwg.mxu0
    %vm135 = vcmask 261120
    %136 = vst.msk [vmem:[#allocation8] sm:$0xff] %vm135, %v121
    %137 = vst.msk [vmem:[#allocation8 + $0x8] sm:$0xff] %vm135, %v124
    %138 = vst.msk [vmem:[#allocation8 + $0x10] sm:$0xff] %vm135, %v129
    %139 = vst.msk [vmem:[#allocation8 + $0x18] sm:$0xff] %vm135, %v132
    // Predicated region
    $region26: #{tpu_custom_call.1} parent=1 // pred_check
      _
    $region27: #{tpu_custom_call.1} parent=1 // pred_check_branch
      %141 = sbr.rel (0) target = $region29
    $region28: #{tpu_custom_call.1} parent=1 // pred_region
      %s143 = ssub.s32 512, 512
      %144 = vsyncadd [#allocation4], %s143
      %s145 = sshll.u32 [#allocation8], 4
      %s146 = int_to_ptr.vmem [resolvable:$true] %s145
      %151 = dma.vmem_to_hbm [thread:$0]  %s146, 512, %s3, [#allocation4], 128, 128, 8
    $region29: #{tpu_custom_call.1} parent=1 // pred_fallthru
      _
    // Predicated region
    $region30: #{tpu_custom_call.1} parent=1 // pred_check
      _
    $region31: #{tpu_custom_call.1} parent=1 // pred_check_branch
      %153 = sbr.rel (0) target = $region33
    $region32: #{tpu_custom_call.1} parent=1 // pred_region
      %154 = dma.done [#allocation4], 512
    $region33: #{tpu_custom_call.1} parent=1 // pred_fallthru
      _
    %155 = vsyncpa [#allocation3], 1
    %156 = vsyncpa [#allocation6], 1
    %157 = vsyncpa [#allocation4], 1

</llo_original>
